<compile_context>
chip_gen: v7x
topology: tpu7x:2x2x1
jax: 0.10.0
libtpu: 0.0.40
codegen_flags: <defaults>
</compile_context>

<pallas_src>
import functools
import math

import jax
import jax.numpy as jnp
from jax import lax
from jax.experimental import pallas as pl
from jax.experimental.pallas import tpu as pltpu

_LANE = 128
_ROW_ALIGN = 16                 # keeps both Box-Muller halves >= (8, 128)
_MAX_BLOCK_ROWS = 4096          # (4096, 128) f32 = 2 MiB per buffer
_TARGET_BLOCKS = 4              # >= 4 grid steps -> pipelining + dual-TC (v7x)
_VMEM_LIMIT = 32 * 1024 * 1024  # safe scoped-VMEM budget on v5e/v6e/v7x
_TWO_PI = 6.283185307179586


def _hash_u32(x):
    """lowbias32-style 32-bit mixer (xor / shift / mul only -> VPU)."""
    x = x ^ (x >> 16)
    x = x * jnp.uint32(0x7FEB352D)
    x = x ^ (x >> 15)
    x = x * jnp.uint32(0x846CA68B)
    x = x ^ (x >> 16)
    return x


def _gaussian_noise_kernel(seed_ref, x_ref, o_ref, *, sigma):
    """out = x * (1 + sigma * z),  z ~ N(0,1) generated on-chip."""
    block_rows, lane = x_ref.shape
    half = block_rows // 2

    # One 32-bit counter per element of the FIRST half of the block; the
    # second half reuses the same (u1, u2) pair through the |sin| branch.
    row = lax.broadcasted_iota(jnp.int32, (half, lane), 0).astype(jnp.uint32)
    col = lax.broadcasted_iota(jnp.int32, (half, lane), 1).astype(jnp.uint32)
    base = pl.program_id(0).astype(jnp.uint32) * jnp.uint32(block_rows * lane)
    ctr = base + (row << 7) + col                          # lane == 128

    key = seed_ref[0].astype(jnp.uint32) * jnp.uint32(0x9E3779B9)
    h1 = _hash_u32(ctr ^ (key + jnp.uint32(0x85EBCA6B)))
    # Cheap second stream: one extra mix round of h1 (instead of re-hashing
    # the counter from scratch).
    t = h1 ^ (key + jnp.uint32(0xC2B2AE35))
    t = t ^ (t >> 16)
    t = t * jnp.uint32(0x846CA68B)
    h2 = t ^ (t >> 13)

    # Top 24 bits -> uniforms.  u1 in (0, 1] so log(u1) is finite; u2 in [0, 1).
    inv24 = jnp.float32(1.0 / 16777216.0)
    u1 = ((h1 >> 8).astype(jnp.int32).astype(jnp.float32) + 1.0) * inv24
    u2 = (h2 >> 8).astype(jnp.int32).astype(jnp.float32) * inv24

    # Box-Muller keeping both outputs.  sin is recovered as sign*sqrt(1-c^2)
    # (mul + sub + sqrt instead of a second VPU trig polynomial); exact by the
    # theta <-> 2*pi - theta symmetry, sign taken from a spare random bit.
    r = jnp.sqrt(jnp.float32(-2.0) * jnp.log(u1))
    c = jnp.cos(jnp.float32(_TWO_PI) * u2)
    s = jnp.sqrt(jnp.maximum(jnp.float32(1.0) - c * c, jnp.float32(0.0)))
    s = jnp.where((h2 & jnp.uint32(1)) == 0, s, -s)

    sig = jnp.float32(sigma)
    one = jnp.float32(1.0)
    x0 = x_ref[:half, :].astype(jnp.float32)
    x1 = x_ref[half:, :].astype(jnp.float32)
    o_ref[:half, :] = (x0 * (one + sig * (r * c))).astype(o_ref.dtype)
    o_ref[half:, :] = (x1 * (one + sig * (r * s))).astype(o_ref.dtype)


def _choose_block_rows(rows):
    """Block height: multiple of 16, capped at _MAX_BLOCK_ROWS, and chosen so
    medium tensors still get >= _TARGET_BLOCKS grid steps (pipelining and
    dual-TensorCore sharding on v7x)."""
    target = pl.cdiv(rows, _TARGET_BLOCKS)
    block = pl.cdiv(target, _ROW_ALIGN) * _ROW_ALIGN
    return max(_ROW_ALIGN, min(_MAX_BLOCK_ROWS, block))


def gaussian_noise(x, *, seed=0, sigma=0.1, training=True,
                   is_relative_detach=False):
    """JAX/Pallas equivalent of GaussianNoise.forward (forward numerics only).

    is_relative_detach only changes gradient flow in PyTorch; the forward
    value is identical, so it is accepted but unused.
    # TODO(synk): detach/stop_gradient semantics only matter for backward,
    # which this forward-only kernel does not implement.
    """
    del is_relative_detach
    if (not training) or sigma == 0:
        return x

    orig_shape = x.shape
    orig_dtype = x.dtype
    total = math.prod(orig_shape)
    if total == 0:
        return x

    rows = pl.cdiv(total, _LANE)
    block_rows = _choose_block_rows(rows)
    # Only tiny tensors (< 16 rows) or a non-multiple-of-128 element count ever
    # need padding; large tensors go in unpadded and the ragged last row-block
    # is handled by Pallas' boundary masking (no extra HBM pad/slice passes).
    padded_rows = max(rows, block_rows)
    padded_total = padded_rows * _LANE

    xf = x.reshape(-1)
    if padded_total != total:
        xf = jnp.pad(xf, (0, padded_total - total))
    xf = xf.reshape(padded_rows, _LANE)            # native dtype, no upcast

    seed_arr = jnp.array([seed], dtype=jnp.int32)
    kernel = functools.partial(_gaussian_noise_kernel, sigma=float(sigma))
    grid = (pl.cdiv(padded_rows, block_rows),)

    out = pl.pallas_call(
        kernel,
        out_shape=jax.ShapeDtypeStruct((padded_rows, _LANE), orig_dtype),
        grid_spec=pltpu.PrefetchScalarGridSpec(
            num_scalar_prefetch=1,
            grid=grid,
            in_specs=[pl.BlockSpec((block_rows, _LANE),
                                   lambda i, seed_ref: (i, 0))],
            out_specs=pl.BlockSpec((block_rows, _LANE),
                                   lambda i, seed_ref: (i, 0)),
        ),
        compiler_params=pltpu.CompilerParams(
            dimension_semantics=("parallel",),
            vmem_limit_bytes=_VMEM_LIMIT),
    )(seed_arr, xf)

    out = out.reshape(-1)
    if padded_total != total:
        out = out[:total]
    return out.reshape(orig_shape)


if __name__ == "__main__":
    key = jax.random.PRNGKey(0)
    # NCHW activation, matching the PyTorch convention used throughout RRDBNet.
    x = jax.random.normal(key, (2, 4, 16, 16), dtype=jnp.float32)

    y = jax.block_until_ready(gaussian_noise(x, seed=0, sigma=0.1, training=True))
    assert y.shape == x.shape and y.dtype == x.dtype

    # Noise must be present but bounded:  y - x = sigma * x * z.
    rel = jnp.abs(y - x) / (jnp.abs(x) + 1e-8)
    assert float(jnp.max(rel)) > 0.0
    assert float(jnp.mean(rel)) < 1.0

    # Loose normality check on the implied z = (y - x) / (sigma * x).
    valid = jnp.abs(x) > 1e-3
    z = jnp.where(valid, (y - x) / (0.1 * x), 0.0)
    n = jnp.sum(valid)
    z_mean = jnp.sum(z) / n
    z_std = jnp.sqrt(jnp.sum(jnp.where(valid, (z - z_mean) ** 2, 0.0)) / n)
    assert abs(float(z_mean)) < 0.25
    assert 0.5 < float(z_std) < 1.5

    # Deterministic for a fixed seed.
    y2 = jax.block_until_ready(gaussian_noise(x, seed=0, sigma=0.1,
                                              training=True))
    assert bool(jnp.all(y2 == y))

    # Multi-block + ragged-final-block path: 120 rows, 32-row blocks, grid=4,
    # last block only 24 valid rows (exercises Pallas boundary masking).
    x_big = jax.random.normal(jax.random.PRNGKey(1), (1, 8, 40, 48),
                              dtype=jnp.float32)
    y_big = jax.block_until_ready(gaussian_noise(x_big, seed=3, sigma=0.1))
    assert y_big.shape == x_big.shape and y_big.dtype == x_big.dtype
    assert bool(jnp.all(jnp.isfinite(y_big)))
    rel_big = jnp.abs(y_big - x_big) / (jnp.abs(x_big) + 1e-8)
    assert float(jnp.max(rel_big)) > 0.0
    assert float(jnp.mean(rel_big)) < 1.0

    # eval mode / sigma == 0 must be identity.
    assert bool(jnp.all(gaussian_noise(x, training=False) == x))
    assert bool(jnp.all(gaussian_noise(x, sigma=0.0) == x))

    print("KERNEL_OK")
</pallas_src>

<mosaic_0001>
module attributes {stable_mosaic.version = 11 : i64} {
  func.func @_gaussian_noise_kernel(%arg0: i32, %arg1: memref<1xi32, #tpu.memory_space<smem>>, %arg2: memref<16x128xf32, #tpu.memory_space<vmem>>, %arg3: memref<16x128xf32, #tpu.memory_space<vmem>>) attributes {dimension_semantics = [#tpu.dimension_semantics<parallel>], iteration_bounds = array<i64: 1>, scalar_prefetch = 1 : i64, scratch_operands = 0 : i64, tpu.core_type = #tpu.core_type<tc>, window_params = [{transform_indices = @transform_0, window_bounds = array<i64: 16, 128>}, {transform_indices = @transform_1, window_bounds = array<i64: 16, 128>}]} {
    %0 = tpu.iota {dimensions = array<i32: 0>} : vector<8x128xi32>
    %1 = tpu.iota {dimensions = array<i32: 1>} : vector<8x128xi32>
    %c2048_i32 = arith.constant 2048 : i32
    %2 = arith.muli %arg0, %c2048_i32 : i32
    %c7_i32 = arith.constant 7 : i32
    %3 = vector.broadcast %c7_i32 : i32 to vector<8x128xi32>
    %4 = arith.shli %0, %3 : vector<8x128xi32>
    %5 = vector.broadcast %2 : i32 to vector<8x128xi32>
    %6 = arith.addi %5, %4 : vector<8x128xi32>
    %7 = arith.addi %6, %1 : vector<8x128xi32>
    %c0 = arith.constant 0 : index
    %8 = memref.load %arg1[%c0] : memref<1xi32, #tpu.memory_space<smem>>
    %c-1640531527_i32 = arith.constant -1640531527 : i32
    %9 = arith.muli %8, %c-1640531527_i32 : i32
    %c-2048144789_i32 = arith.constant -2048144789 : i32
    %10 = arith.addi %9, %c-2048144789_i32 : i32
    %11 = vector.broadcast %10 : i32 to vector<8x128xi32>
    %12 = arith.xori %7, %11 : vector<8x128xi32>
    %c16_i32 = arith.constant 16 : i32
    %13 = vector.broadcast %c16_i32 : i32 to vector<8x128xi32>
    %14 = arith.shrui %12, %13 : vector<8x128xi32>
    %15 = arith.xori %12, %14 : vector<8x128xi32>
    %c2146121005_i32 = arith.constant 2146121005 : i32
    %16 = vector.broadcast %c2146121005_i32 : i32 to vector<8x128xi32>
    %17 = arith.muli %15, %16 : vector<8x128xi32>
    %c15_i32 = arith.constant 15 : i32
    %18 = vector.broadcast %c15_i32 : i32 to vector<8x128xi32>
    %19 = arith.shrui %17, %18 : vector<8x128xi32>
    %20 = arith.xori %17, %19 : vector<8x128xi32>
    %c-2073254261_i32 = arith.constant -2073254261 : i32
    %21 = vector.broadcast %c-2073254261_i32 : i32 to vector<8x128xi32>
    %22 = arith.muli %20, %21 : vector<8x128xi32>
    %c16_i32_0 = arith.constant 16 : i32
    %23 = vector.broadcast %c16_i32_0 : i32 to vector<8x128xi32>
    %24 = arith.shrui %22, %23 : vector<8x128xi32>
    %25 = arith.xori %22, %24 : vector<8x128xi32>
    %c-1028477387_i32 = arith.constant -1028477387 : i32
    %26 = arith.addi %9, %c-1028477387_i32 : i32
    %27 = vector.broadcast %26 : i32 to vector<8x128xi32>
    %28 = arith.xori %25, %27 : vector<8x128xi32>
    %c16_i32_1 = arith.constant 16 : i32
    %29 = vector.broadcast %c16_i32_1 : i32 to vector<8x128xi32>
    %30 = arith.shrui %28, %29 : vector<8x128xi32>
    %31 = arith.xori %28, %30 : vector<8x128xi32>
    %c-2073254261_i32_2 = arith.constant -2073254261 : i32
    %32 = vector.broadcast %c-2073254261_i32_2 : i32 to vector<8x128xi32>
    %33 = arith.muli %31, %32 : vector<8x128xi32>
    %c13_i32 = arith.constant 13 : i32
    %34 = vector.broadcast %c13_i32 : i32 to vector<8x128xi32>
    %35 = arith.shrui %33, %34 : vector<8x128xi32>
    %36 = arith.xori %33, %35 : vector<8x128xi32>
    %c8_i32 = arith.constant 8 : i32
    %37 = vector.broadcast %c8_i32 : i32 to vector<8x128xi32>
    %38 = arith.shrui %25, %37 : vector<8x128xi32>
    %39 = arith.sitofp %38 : vector<8x128xi32> to vector<8x128xf32>
    %cst = arith.constant 1.000000e+00 : f32
    %40 = vector.broadcast %cst : f32 to vector<8x128xf32>
    %41 = arith.addf %39, %40 : vector<8x128xf32>
    %cst_3 = arith.constant 5.96046448E-8 : f32
    %42 = vector.broadcast %cst_3 : f32 to vector<8x128xf32>
    %43 = arith.mulf %41, %42 : vector<8x128xf32>
    %c8_i32_4 = arith.constant 8 : i32
    %44 = vector.broadcast %c8_i32_4 : i32 to vector<8x128xi32>
    %45 = arith.shrui %36, %44 : vector<8x128xi32>
    %46 = arith.sitofp %45 : vector<8x128xi32> to vector<8x128xf32>
    %cst_5 = arith.constant 5.96046448E-8 : f32
    %47 = vector.broadcast %cst_5 : f32 to vector<8x128xf32>
    %48 = arith.mulf %46, %47 : vector<8x128xf32>
    %49 = math.log %43 : vector<8x128xf32>
    %cst_6 = arith.constant -2.000000e+00 : f32
    %50 = vector.broadcast %cst_6 : f32 to vector<8x128xf32>
    %51 = arith.mulf %50, %49 : vector<8x128xf32>
    %52 = math.sqrt %51 : vector<8x128xf32>
    %cst_7 = arith.constant 6.28318548 : f32
    %53 = vector.broadcast %cst_7 : f32 to vector<8x128xf32>
    %54 = arith.mulf %53, %48 : vector<8x128xf32>
    %55 = math.cos %54 : vector<8x128xf32>
    %56 = arith.mulf %55, %55 : vector<8x128xf32>
    %cst_8 = arith.constant 1.000000e+00 : f32
    %57 = vector.broadcast %cst_8 : f32 to vector<8x128xf32>
    %58 = arith.subf %57, %56 : vector<8x128xf32>
    %cst_9 = arith.constant 0.000000e+00 : f32
    %59 = vector.broadcast %cst_9 : f32 to vector<8x128xf32>
    %60 = arith.maximumf %58, %59 : vector<8x128xf32>
    %61 = math.sqrt %60 : vector<8x128xf32>
    %c1_i32 = arith.constant 1 : i32
    %62 = vector.broadcast %c1_i32 : i32 to vector<8x128xi32>
    %63 = arith.andi %36, %62 : vector<8x128xi32>
    %c0_i32 = arith.constant 0 : i32
    %64 = vector.broadcast %c0_i32 : i32 to vector<8x128xi32>
    %65 = arith.cmpi eq, %63, %64 : vector<8x128xi32>
    %cst_10 = arith.constant 0.000000e+00 : f32
    %66 = vector.broadcast %cst_10 : f32 to vector<8x128xf32>
    %67 = arith.subf %66, %61 : vector<8x128xf32>
    %68 = arith.select %65, %61, %67 : vector<8x128xi1>, vector<8x128xf32>
    %c0_11 = arith.constant 0 : index
    %c0_12 = arith.constant 0 : index
    %69 = vector.load %arg2[%c0_11, %c0_12] : memref<16x128xf32, #tpu.memory_space<vmem>>, vector<8x128xf32>
    %c8 = arith.constant 8 : index
    %c0_13 = arith.constant 0 : index
    %70 = vector.load %arg2[%c8, %c0_13] : memref<16x128xf32, #tpu.memory_space<vmem>>, vector<8x128xf32>
    %71 = arith.mulf %52, %55 : vector<8x128xf32>
    %cst_14 = arith.constant 1.000000e-01 : f32
    %72 = vector.broadcast %cst_14 : f32 to vector<8x128xf32>
    %73 = arith.mulf %72, %71 : vector<8x128xf32>
    %cst_15 = arith.constant 1.000000e+00 : f32
    %74 = vector.broadcast %cst_15 : f32 to vector<8x128xf32>
    %75 = arith.addf %74, %73 : vector<8x128xf32>
    %76 = arith.mulf %69, %75 : vector<8x128xf32>
    %c0_16 = arith.constant 0 : index
    %c0_17 = arith.constant 0 : index
    %77 = vector.load %arg3[%c0_16, %c0_17] : memref<16x128xf32, #tpu.memory_space<vmem>>, vector<8x128xf32>
    tpu.vector_store %arg3[%c0_16, %c0_17], %76 {strides = array<i32>} : memref<16x128xf32, #tpu.memory_space<vmem>>, vector<8x128xf32>,
    %78 = arith.mulf %52, %68 : vector<8x128xf32>
    %cst_18 = arith.constant 1.000000e-01 : f32
    %79 = vector.broadcast %cst_18 : f32 to vector<8x128xf32>
    %80 = arith.mulf %79, %78 : vector<8x128xf32>
    %cst_19 = arith.constant 1.000000e+00 : f32
    %81 = vector.broadcast %cst_19 : f32 to vector<8x128xf32>
    %82 = arith.addf %81, %80 : vector<8x128xf32>
    %83 = arith.mulf %70, %82 : vector<8x128xf32>
    %c8_20 = arith.constant 8 : index
    %c0_21 = arith.constant 0 : index
    %84 = vector.load %arg3[%c8_20, %c0_21] : memref<16x128xf32, #tpu.memory_space<vmem>>, vector<8x128xf32>
    tpu.vector_store %arg3[%c8_20, %c0_21], %83 {strides = array<i32>} : memref<16x128xf32, #tpu.memory_space<vmem>>, vector<8x128xf32>,
    return
  }
  func.func @transform_0(%arg0: i32, %arg1: memref<1xi32, #tpu.memory_space<smem>>) -> (i32, i32) {
    %c0_i32 = arith.constant 0 : i32
    %c0_i32_0 = arith.constant 0 : i32
    return %arg0, %c0_i32 : i32, i32
  }
  func.func @transform_1(%arg0: i32, %arg1: memref<1xi32, #tpu.memory_space<smem>>) -> (i32, i32) {
    %c0_i32 = arith.constant 0 : i32
    %c0_i32_0 = arith.constant 0 : i32
    return %arg0, %c0_i32 : i32, i32
  }
}

</mosaic_0001>

<llo_original>
// kernel: tpu_custom_call.1
$region0: #{tpu_custom_call.1}
  #allocation0 [shape = 'u32[]', space=smem, size = 0x4, offset = 0x4, fixed_abs, tag = 'smem constant byte address 0x4 - core index']
  #allocation1 [shape = 'u32[144,128]{1,0:T(1,128)}', space=vmem, size = 0x12000, scoped, tag = 'internal scratch']
  #allocation2 [shape = 's32[1]{0}', space=sflag, size = 0x4, scoped, tag = 'scoped memory for tpu_custom_call.1']
  #allocation3 [shape = 's32[1]{0:T(128)S(6)}', space=smem, size = 0x200, scoped, tag = 'prefetched SMEM operand 0']
  %s0 = inlined_call_operand.<no memory space> [shape: s32[1], index: 0, kind: input, shape index: {}]
  %s1 = inlined_call_operand.hbm [shape: f32[16,128], index: 1, kind: input, shape index: {}]
  %s2 = inlined_call_operand.hbm [shape: f32[16,128], index: 2, kind: output, shape index: {}]
  %s3 = sld [smem:[#allocation0]]
  $region18: #{tpu_custom_call.1} parent=0
    _
  %s5 = ssub.s32 1, %s3
  %s6 = scalar_select 0, %s5, %s3
  %7 = sst [smem:[#allocation3]] %s0
  $region1: #{tpu_custom_call.1} parent=0
    #allocation4 [shape = 'u8[8192]{0}', space=vmem, size = 0x2000, scoped, tag = 'input window, operand 1, single buffered']
    #allocation5 [shape = 's32[1]{0}', space=sflag, size = 0x4, scoped, tag = 'scoped memory for tpu_custom_call.1']
    #allocation6 [shape = 's32[1]{0}', space=sflag, size = 0x4, scoped, tag = 'scoped memory for tpu_custom_call.1']
    #allocation7 [shape = 'u8[8192]{0}', space=vmem, size = 0x2000, scoped, tag = 'output window, operand 0, single buffered']
    %8 = vsyncpa [#allocation5], 0
    %9 = vsyncpa [#allocation6], 0
    // Predicated region
    $region2: #{tpu_custom_call.1} parent=1 // pred_check
      _
    $region3: #{tpu_custom_call.1} parent=1 // pred_check_branch
      %11 = sbr.rel (0) target = $region5
    $region4: #{tpu_custom_call.1} parent=1 // pred_region
      %s13 = ssub.s32 256, 256
      %14 = vsyncadd [#allocation5], %s13
      %s15 = sshll.u32 [#allocation4], 4
      %s16 = int_to_ptr.vmem [resolvable:$true] %s15
      %21 = dma.hbm_to_vmem [thread:$0]  %s1, 256, %s16, [#allocation5], 128, 128, 8
    $region5: #{tpu_custom_call.1} parent=1 // pred_fallthru
      _
    // Predicated region
    $region6: #{tpu_custom_call.1} parent=1 // pred_check
      _
    $region7: #{tpu_custom_call.1} parent=1 // pred_check_branch
      %23 = sbr.rel (0) target = $region9
    $region8: #{tpu_custom_call.1} parent=1 // pred_region
      %24 = dma.done [#allocation5], 256
    $region9: #{tpu_custom_call.1} parent=1 // pred_fallthru
      _
    %v25 = vlaneseq
    %v26 = vshrl.u32 %v25, 7
    %v27 = vlaneseq
    %v28 = vand.u32 %v27, 127
    %s29 = smul.u32 0, 2048
    %v30 = vshll.u32 %v26, 7
    %v31 = vstv %s29
    %v32 = vadd.s32 %v31, %v30
    %v33 = vadd.s32 %v32, %v28
    %s34 = sld [smem:[#allocation3]]
    %s35 = smul.u32 %s34, 2654435769
    %s36 = sadd.s32 %s35, 2246822507
    %v37 = vstv %s36
    %v38 = vxor.u32 %v33, %v37
    %v39 = vshrl.u32 %v38, 16
    %v40 = vxor.u32 %v38, %v39
    %v41 = vmul.u32 %v40, 2146121005
    %v42 = vshrl.u32 %v41, 15
    %v43 = vxor.u32 %v41, %v42
    %v44 = vmul.u32 %v43, 2221713035
    %v45 = vshrl.u32 %v44, 16
    %v46 = vxor.u32 %v44, %v45
    %s47 = sadd.s32 %s35, 3266489909
    %v48 = vstv %s47
    %v49 = vxor.u32 %v46, %v48
    %v50 = vshrl.u32 %v49, 16
    %v51 = vxor.u32 %v49, %v50
    %v52 = vmul.u32 %v51, 2221713035
    %v53 = vshrl.u32 %v52, 13
    %v54 = vxor.u32 %v52, %v53
    %v55 = vshrl.u32 %v46, 8
    %v56 = vcvt.s32.f32 %v55
    %v57 = vadd.f32 %v56, 1.0
    %v58 = vmul.f32 %v57, 5.9604645e-08
    %v59 = vshrl.u32 %v54, 8
    %v60 = vcvt.s32.f32 %v59
    %v61 = vmul.f32 %v60, 5.9604645e-08
    %v62 = vlog2.pop %v58
    %v63 = vmul.f32 %v62, 0.6931472
    %v64 = vmul.f32 %v63, -2.0
    %v65 = vrsqrt.pop %v64
    %v66 = vmul.f32 %v64, %v65
    %vm67 = vcmp.eq.f32.partialorder %v64, inf
    %v68 = vsel %vm67, %v64, %v66
    %vm69 = vcmp.eq.f32.partialorder %v64, 0.0
    %v70 = vand.u32 %v64, 2147483648
    %v71 = vsel %vm69, %v70, %v68
    %v72 = vmul.f32 %v61, 6.2831855
    %v73 = vand.u32 2147483647, %v72
    %vm74 = vcmp.le.f32.partialorder %v73, 0.7853982
    %vm75 = vcmp.lt.s32.totalorder %v72, 0
    %v76 = vand.u32 %v72, 2139095040
    %v77 = vshrl.u32 %v76, 23
    %v78 = vsub.s32 %v77, 127
    %v79 = vand.u32 2147483647, %v72
    %v80 = vand.u32 %v79, 8388607
    %v81 = vor.u32 %v80, 8388608
    %v82 = vsub.s32 0, %v81
    %v83 = vadd.s32 %v78, 1
    %vm84 = vcmp.gt.s32.totalorder %v83, 0
    %v85 = vsel %vm84, %v83, 0
    %v86 = vshrl.u32 %v85, 5
    %v87 = vand.u32 %v85, 31
    %v88 = vsub.s32 32, %v87
    %v89 = vshrl.u32 683565275, %v88
    %v90 = vshll.u32 683565275, %v87
    %v91 = vshrl.u32 2475754826, %v88
    %v92 = vor.u32 %v90, %v91
    %v93 = vshll.u32 2475754826, %v87
    %v94 = vshrl.u32 2131351028, %v88
    %v95 = vor.u32 %v93, %v94
    %v96 = vshll.u32 2131351028, %v87
    %v97 = vshrl.u32 2102212464, %v88
    %v98 = vor.u32 %v96, %v97
    %v99 = vshll.u32 2102212464, %v87
    %v100 = vshrl.u32 920167782, %v88
    %v101 = vor.u32 %v99, %v100
    %v102 = vshll.u32 920167782, %v87
    %v103 = vshrl.u32 1326507024, %v88
    %v104 = vor.u32 %v102, %v103
    %vm105 = vcmp.lt.s32.totalorder %v86, 1
    %vm106 = vcmp.lt.s32.totalorder %v86, 2
    %vm107 = vcmp.lt.s32.totalorder %v86, 3
    %vm108 = vcmp.lt.s32.totalorder %v86, 4
    %v109 = vsel %vm105, %v89, %v92
    %v110 = vsel %vm108, %v98, 2102212464
    %v111 = vsel %vm107, %v95, %v110
    %v112 = vsel %vm106, %v109, %v111
    %v113 = vsel %vm105, %v92, %v95
    %v114 = vsel %vm108, %v101, 920167782
    %v115 = vsel %vm107, %v98, %v114
    %v116 = vsel %vm106, %v113, %v115
    %v117 = vsel %vm105, %v95, %v98
    %v118 = vsel %vm108, %v104, 1326507024
    %v119 = vsel %vm107, %v101, %v118
    %v120 = vsel %vm106, %v117, %v119
    %v121 = vshll.u32 %v81, 8
    %v122 = vmul.u32.u64.compose %v121, %v120
    %v123 = vextract.low.u32 %v122
    %v124 = vextract.high.u32 %v122
    %v125 = vmul.u32.u64.compose %v121, %v116
    %v126 = vextract.low.u32 %v125
    %v127 = vextract.high.u32 %v125
    %v128 = vmul.u32 %v121, %v112
    %v129 = vadd.s32 %v124, %v126
    %vm130 = vc.u32 %v124, %v126
    %v131 = vadd.s32 %v127, 1
    %v132 = vsel %vm130, %v131, %v127
    %v133 = vadd.s32 %v128, %v132
    %v134 = vadd.s32 %v133, 536870912
    %v135 = vshrl.u32 %v134, 30
    %v136 = vshll.u32 %v135, 30
    %v137 = vsub.s32 %v133, %v136
    %vm138 = vcmp.lt.s32.totalorder %v137, 0
    %v139 = vsub.s32 0, %v137
    %v140 = vsel %vm138, %v139, %v137
    %v141 = vclz %v140
    %v142 = vsub.s32 %v141, 2
    %vm143 = vcmp.gt.s32.totalorder 0, %v142
    %v144 = vsel %vm143, 0, %v142
    %v145 = vsub.s32 32, %v144
    %v146 = vshll.u32 %v137, %v144
    %v147 = vshrl.u32 %v129, %v145
    %v148 = vor.u32 %v146, %v147
    %v149 = vsub.s32 4294967266, %v144
    %v150 = vadd.s32 %v149, 127
    %v151 = vshll.u32 %v150, 23
    %v152 = vor.u32 4788187, %v151
    %v153 = vand.u32 2147483647, %v152
    %v155 = vcvt.s32.f32 %v148
    %v156 = vmul.f32 %v155, %v153
    %v157 = vxor.u32 %v156, 2147483648
    %v158 = vsel %vm75, %v157, %v156
    %v159 = vsub.s32 4, %v135
    %v160 = vsel %vm75, %v159, %v135
    %v161 = vsel %vm74, %v72, %v158
    %v162 = vsel %vm74, 0, %v160
    %v163 = vcosq.f32.pop %v161
    %v164 = vsinq.f32.pop %v161
    %vm165 = vweird.f32 %v72
    %v166 = vand.u32 %v162, 3
    %vm167 = vcmp.lt.s32.totalorder %v166, 2
    %vm168 = vcmp.eq.s32.totalorder %v166, 0
    %v169 = vxor.u32 %v164, 2147483648
    %v170 = vsel %vm168, %v163, %v169
    %vm171 = vcmp.eq.s32.totalorder %v166, 2
    %v172 = vxor.u32 %v163, 2147483648
    %v173 = vsel %vm171, %v172, %v164
    %v174 = vsel %vm167, %v170, %v173
    %v175 = vsel %vm165, nan, %v174
    %v176 = vmul.f32 %v175, %v175
    %v177 = vsub.f32 1.0, %v176
    %v178 = vmax.f32 %v177, 0.0
    %v179 = vrsqrt.pop %v178
    %v180 = vmul.f32 %v178, %v179
    %vm181 = vcmp.eq.f32.partialorder %v178, inf
    %v182 = vsel %vm181, %v178, %v180
    %vm183 = vcmp.eq.f32.partialorder %v178, 0.0
    %v184 = vand.u32 %v178, 2147483648
    %v185 = vsel %vm183, %v184, %v182
    %v186 = vand.u32 %v54, 1
    %vm187 = vcmp.eq.s32.totalorder %v186, 0
    %v188 = vsub.f32 0.0, %v185
    %v189 = vsel %vm187, %v185, %v188
    %v190 = vld [vmem:[#allocation4] sm:$0xff]
    %v191 = vld [vmem:[#allocation4 + $0x8] sm:$0xff]
    %v192 = vmul.f32 %v71, %v175
    %v193 = vmul.f32 %v192, 0.1
    %v194 = vadd.f32 %v193, 1.0
    %v195 = vmul.f32 %v190, %v194
    %196 = vst [vmem:[#allocation7] sm:$0xff] %v195
    %v197 = vmul.f32 %v71, %v189
    %v198 = vmul.f32 %v197, 0.1
    %v199 = vadd.f32 %v198, 1.0
    %v200 = vmul.f32 %v191, %v199
    %201 = vst [vmem:[#allocation7 + $0x8] sm:$0xff] %v200
    // Predicated region
    $region10: #{tpu_custom_call.1} parent=1 // pred_check
      _
    $region11: #{tpu_custom_call.1} parent=1 // pred_check_branch
      %203 = sbr.rel (0) target = $region13
    $region12: #{tpu_custom_call.1} parent=1 // pred_region
      %s205 = ssub.s32 256, 256
      %206 = vsyncadd [#allocation6], %s205
      %s207 = sshll.u32 [#allocation7], 4
      %s208 = int_to_ptr.vmem [resolvable:$true] %s207
      %213 = dma.vmem_to_hbm [thread:$0]  %s208, 256, %s2, [#allocation6], 128, 128, 8
    $region13: #{tpu_custom_call.1} parent=1 // pred_fallthru
      _
    // Predicated region
    $region14: #{tpu_custom_call.1} parent=1 // pred_check
      _
    $region15: #{tpu_custom_call.1} parent=1 // pred_check_branch
      %215 = sbr.rel (0) target = $region17
    $region16: #{tpu_custom_call.1} parent=1 // pred_region
      %216 = dma.done [#allocation6], 256
    $region17: #{tpu_custom_call.1} parent=1 // pred_fallthru
      _
    %217 = vsyncpa [#allocation5], 1
    %218 = vsyncpa [#allocation6], 1

</llo_original>
